<compile_context>
chip_gen: v6e
topology: v6e:2x2x1
jax: 0.10.0
libtpu: 0.0.40
codegen_flags: <defaults>
</compile_context>

<pallas_src>
import numpy as np
import jax
import jax.numpy as jnp
from jax.experimental import pallas as pl
from jax.experimental.pallas import tpu as pltpu


def _round_up(x, m):
    return -(-x // m) * m


def _device_tuning():
    """Per-generation (total VMEM budget, vmem_limit_bytes, dual-TC hint)."""
    try:
        kind = jax.devices()[0].device_kind.lower()
    except Exception:
        kind = ""
    small_vmem = "7" in kind                      # v7x: 64 MiB VMEM per TC
    dual_tc = any(t in kind for t in ("v4", "v5p", "7"))
    if small_vmem or "tpu" not in kind:
        # v7x or unknown chip: stay conservative.
        return 20 * 2**20, 48 * 2**20, dual_tc
    # v5e / v6e: 128 MiB physical VMEM, single TensorCore -> larger tiles.
    return 32 * 2**20, 64 * 2**20, dual_tc


def _choose_tb(B, C, K, HW, has_weight, budget):
    """Batch-tile size from a complete (input + intermediates) VMEM estimate."""
    c_p = _round_up(C, 8)
    k_p = _round_up(K, 8)
    hw_p = _round_up(HW, 128)
    per_b = 2 * c_p * hw_p * 4        # double-buffered input block
    per_b += 4 * k_p * hw_p * 4       # feat / e / e*pos live intermediates
    if has_weight:
        per_b += k_p * c_p * 4        # broadcast weight rows
    return max(1, min(B, budget // per_b))


def _make_spatial_softmax_kernel(tb, K, has_weight):
    """One grid step == one batch tile: batched matmul + vectorized softmax."""

    def body(x_ref, w_ref, pos_ref, o_ref):
        x = x_ref[...]                                       # (tb, C, HW)
        if has_weight:
            # 1x1 conv == channel-mixing matmul; bias cancels through softmax.
            w_b = jnp.broadcast_to(w_ref[...], (tb, K, x.shape[1]))
            feat = jnp.einsum("bkc,bcs->bks", w_b, x,
                              preferred_element_type=jnp.float32)  # (tb,K,HW)
        else:
            feat = x.astype(jnp.float32)                     # K == C

        hw = feat.shape[-1]
        px = pos_ref[0:1, :].reshape(1, 1, hw)               # (1, 1, HW)
        py = pos_ref[1:2, :].reshape(1, 1, hw)

        # Vectorized, unnormalized softmax over the spatial (lane) axis for
        # all tb*K rows at once.  No explicit padding mask is needed: HW is
        # the full-extent last block dim, Mosaic handles lane padding.
        m = jnp.max(feat, axis=-1, keepdims=True)            # (tb, K, 1)
        e = jnp.exp(feat - m)                                # (tb, K, HW)
        s = jnp.sum(e, axis=-1)                              # (tb, K)
        sx = jnp.sum(e * px, axis=-1)                        # (tb, K)
        sy = jnp.sum(e * py, axis=-1)                        # (tb, K)

        # Deferred normalization at (tb, K) size.  Exact divide (approx
        # reciprocal would exceed the 1e-5 tolerance vs. the reference).
        inv = 1.0 / s
        o_ref[0] = (sx * inv).astype(o_ref.dtype)            # two slab stores
        o_ref[1] = (sy * inv).astype(o_ref.dtype)

    if has_weight:
        def kernel(x_ref, w_ref, pos_ref, o_ref):
            body(x_ref, w_ref, pos_ref, o_ref)
    else:
        def kernel(x_ref, pos_ref, o_ref):
            body(x_ref, None, pos_ref, o_ref)
    return kernel


def spatial_softmax(features, weight, bias, pos_grid, *, block_batch=None):
    """
    Args:
        features: (B, C, H, W) float32 feature maps.
        weight:   (K, C) float32 1x1-conv weight, or None (num_kp=None path).
        bias:     (K,) float32 or None.  Ignored inside the kernel: a
                  per-channel bias is a mathematical no-op through the
                  row-wise spatial softmax.
        pos_grid: (H*W, 2) float32 normalized coordinate grid (PyTorch layout).
    Returns:
        (B, K, 2) float32 keypoints.
    """
    del bias  # provably cancels through the row-wise softmax
    B, C, H, W = features.shape
    HW = H * W
    has_weight = weight is not None
    K = weight.shape[0] if has_weight else C

    # Free reshape only — no pad, no transpose, no extra HBM pass.
    x = features.reshape(B, C, HW)
    pos_t = pos_grid.T                                       # (2, HW) lane-dense

    budget, vmem_limit, dual_tc = _device_tuning()
    if block_batch is not None:
        tb = max(1, min(int(block_batch), B))
    else:
        tb = _choose_tb(B, C, K, HW, has_weight, budget)
        if dual_tc and B >= 2:
            tb = min(tb, -(-B // 2))    # keep >=2 grid steps for 2 TensorCores

    # The output block puts the batch tile on the sublane axis, so tb must be
    # a multiple of 8 or equal to the full batch.  No `while B % tb` collapse:
    # a ragged final block (pl.cdiv grid) handles non-divisible B.
    if tb >= B:
        tb = B
    elif tb % 8:
        tb = max(8, (tb // 8) * 8)
        if tb >= B:
            tb = B

    grid = (pl.cdiv(B, tb),)
    kernel = _make_spatial_softmax_kernel(tb, K, has_weight)

    in_specs = [pl.BlockSpec((tb, C, HW), lambda i: (i, 0, 0))]
    operands = [x]
    if has_weight:
        in_specs.append(pl.BlockSpec((K, C), lambda i: (0, 0)))
        operands.append(weight)
    in_specs.append(pl.BlockSpec((2, HW), lambda i: (0, 0)))
    operands.append(pos_t)

    out = pl.pallas_call(
        kernel,
        out_shape=jax.ShapeDtypeStruct((2, B, K), jnp.float32),
        grid_spec=pltpu.PrefetchScalarGridSpec(
            num_scalar_prefetch=0,
            grid=grid,
            in_specs=in_specs,
            out_specs=pl.BlockSpec((2, tb, K), lambda i: (0, i, 0)),
        ),
        compiler_params=pltpu.CompilerParams(
            dimension_semantics=("parallel",),
            vmem_limit_bytes=vmem_limit),
    )(*operands)

    # Tiny (2, B, K) -> (B, K, 2) transpose in the wrapper.
    return jnp.transpose(out, (1, 2, 0))


def make_pos_grid(H, W):
    # Matches the PyTorch buffer construction exactly: (H*W, 2) with (x, y).
    pos_x, pos_y = np.meshgrid(np.linspace(-1.0, 1.0, W),
                               np.linspace(-1.0, 1.0, H))
    pos_x = pos_x.reshape(H * W, 1).astype(np.float32)
    pos_y = pos_y.reshape(H * W, 1).astype(np.float32)
    return jnp.asarray(np.concatenate([pos_x, pos_y], axis=1))


def reference_spatial_softmax(features, weight, bias, pos_grid):
    B, C, H, W = features.shape
    if weight is None:
        weight = jnp.eye(C, dtype=features.dtype)
        bias = jnp.zeros((C,), dtype=features.dtype)
    K = weight.shape[0]
    feat = jnp.einsum("kc,bchw->bkhw", weight, features) + bias[None, :, None, None]
    feat = feat.reshape(B * K, H * W)
    attn = jax.nn.softmax(feat, axis=-1)
    return (attn @ pos_grid).reshape(B, K, 2)


if __name__ == "__main__":
    key = jax.random.PRNGKey(0)

    # --- Case 1: learnable 1x1 conv (num_kp=8), HW multiple of 128 ----------
    B, C, H, W = 2, 4, 16, 16
    num_kp = 8
    kx, kw, kb, k2 = jax.random.split(key, 4)
    features = jax.random.normal(kx, (B, C, H, W), dtype=jnp.float32)
    weight = jax.random.normal(kw, (num_kp, C), dtype=jnp.float32) * 0.1
    bias = jax.random.normal(kb, (num_kp,), dtype=jnp.float32) * 0.1
    pos_grid = make_pos_grid(H, W)

    out = spatial_softmax(features, weight, bias, pos_grid)
    out = jax.block_until_ready(out)
    ref = reference_spatial_softmax(features, weight, bias, pos_grid)
    assert out.shape == (B, num_kp, 2)
    np.testing.assert_allclose(np.asarray(out), np.asarray(ref),
                               rtol=1e-5, atol=1e-5)

    # --- Case 2: num_kp=None (identity path), HW NOT a multiple of 128 ------
    B2, C2, H2, W2 = 3, 4, 12, 12          # HW = 144, handled without padding
    feats2 = jax.random.normal(k2, (B2, C2, H2, W2), dtype=jnp.float32)
    pos_grid2 = make_pos_grid(H2, W2)

    out2 = spatial_softmax(feats2, None, None, pos_grid2)
    out2 = jax.block_until_ready(out2)
    ref2 = reference_spatial_softmax(feats2, None, None, pos_grid2)
    assert out2.shape == (B2, C2, 2)
    np.testing.assert_allclose(np.asarray(out2), np.asarray(ref2),
                               rtol=1e-5, atol=1e-5)

    print("KERNEL_OK")
</pallas_src>

<mosaic_0001>
module attributes {stable_mosaic.version = 11 : i64} {
  func.func @kernel(%arg0: i32, %arg1: memref<2x4x256xf32, #tpu.memory_space<vmem>>, %arg2: memref<8x4xf32, #tpu.memory_space<vmem>>, %arg3: memref<2x256xf32, #tpu.memory_space<vmem>>, %arg4: memref<2x2x8xf32, #tpu.memory_space<vmem>>) attributes {dimension_semantics = [#tpu.dimension_semantics<parallel>], iteration_bounds = array<i64: 1>, scalar_prefetch = 0 : i64, scratch_operands = 0 : i64, tpu.core_type = #tpu.core_type<tc>, window_params = [{transform_indices = @transform_0, window_bounds = array<i64: 2, 4, 256>}, {pipeline_mode = #tpu.pipeline_mode<synchronous>, transform_indices = @transform_1, window_bounds = array<i64: 8, 4>}, {pipeline_mode = #tpu.pipeline_mode<synchronous>, transform_indices = @transform_2, window_bounds = array<i64: 2, 256>}, {transform_indices = @transform_3, window_bounds = array<i64: 2, 2, 8>}]} {
    %c0 = arith.constant 0 : index
    %c0_0 = arith.constant 0 : index
    %c0_1 = arith.constant 0 : index
    %0 = vector.load %arg1[%c0, %c0_0, %c0_1] : memref<2x4x256xf32, #tpu.memory_space<vmem>>, vector<2x4x256xf32>
    %c0_2 = arith.constant 0 : index
    %c0_3 = arith.constant 0 : index
    %1 = vector.load %arg2[%c0_2, %c0_3] : memref<8x4xf32, #tpu.memory_space<vmem>>, vector<8x4xf32>
    %2 = vector.shape_cast %1 : vector<8x4xf32> to vector<1x8x4xf32>
    %3 = vector.broadcast %2 : vector<1x8x4xf32> to vector<2x8x4xf32>
    "tpu.trace_start"() <{level = 10 : i32, message = "bkc,bcs->bks"}> : () -> ()
    %cst = arith.constant dense<0.000000e+00> : vector<2x8x256xf32>
    %4 = tpu.matmul %3, %0, %cst {dimension_numbers = #tpu.dot_dimension_numbers<[2], [1], [1], [2], [0, 0, 0, 1, 1, 2], [0], [0]>} : vector<2x8x4xf32>, vector<2x4x256xf32>, vector<2x8x256xf32> -> vector<2x8x256xf32>
    "tpu.trace_stop"() : () -> ()
    %c0_4 = arith.constant 0 : index
    %c0_5 = arith.constant 0 : index
    %5 = vector.load %arg3[%c0_4, %c0_5] : memref<2x256xf32, #tpu.memory_space<vmem>>, vector<1x256xf32>
    %6 = vector.shape_cast %5 : vector<1x256xf32> to vector<1x1x256xf32>
    %c1 = arith.constant 1 : index
    %c0_6 = arith.constant 0 : index
    %7 = vector.load %arg3[%c1, %c0_6] : memref<2x256xf32, #tpu.memory_space<vmem>>, vector<1x256xf32>
    %8 = vector.shape_cast %7 : vector<1x256xf32> to vector<1x1x256xf32>
    %cst_7 = arith.constant dense<0xFF800000> : vector<2x8xf32>
    %9 = vector.multi_reduction <maximumf>, %4, %cst_7 [2] : vector<2x8x256xf32> to vector<2x8xf32>
    %10 = vector.shape_cast %9 : vector<2x8xf32> to vector<2x8x1xf32>
    %11 = vector.broadcast %10 : vector<2x8x1xf32> to vector<2x8x256xf32>
    %12 = arith.subf %4, %11 : vector<2x8x256xf32>
    %13 = math.exp %12 : vector<2x8x256xf32>
    %cst_8 = arith.constant dense<0.000000e+00> : vector<2x8xf32>
    %14 = vector.multi_reduction <add>, %13, %cst_8 [2] : vector<2x8x256xf32> to vector<2x8xf32>
    %15 = vector.broadcast %6 : vector<1x1x256xf32> to vector<2x8x256xf32>
    %16 = arith.mulf %13, %15 : vector<2x8x256xf32>
    %cst_9 = arith.constant dense<0.000000e+00> : vector<2x8xf32>
    %17 = vector.multi_reduction <add>, %16, %cst_9 [2] : vector<2x8x256xf32> to vector<2x8xf32>
    %18 = vector.broadcast %8 : vector<1x1x256xf32> to vector<2x8x256xf32>
    %19 = arith.mulf %13, %18 : vector<2x8x256xf32>
    %cst_10 = arith.constant dense<0.000000e+00> : vector<2x8xf32>
    %20 = vector.multi_reduction <add>, %19, %cst_10 [2] : vector<2x8x256xf32> to vector<2x8xf32>
    %cst_11 = arith.constant 1.000000e+00 : f32
    %21 = vector.broadcast %cst_11 : f32 to vector<2x8xf32>
    %22 = arith.divf %21, %14 : vector<2x8xf32>
    %23 = arith.mulf %17, %22 : vector<2x8xf32>
    %c0_12 = arith.constant 0 : index
    %c0_13 = arith.constant 0 : index
    %c0_14 = arith.constant 0 : index
    %24 = vector.load %arg4[%c0_12, %c0_13, %c0_14] : memref<2x2x8xf32, #tpu.memory_space<vmem>>, vector<1x2x8xf32>
    %25 = vector.shape_cast %24 : vector<1x2x8xf32> to vector<2x8xf32>
    %26 = vector.shape_cast %23 : vector<2x8xf32> to vector<1x2x8xf32>
    tpu.vector_store %arg4[%c0_12, %c0_13, %c0_14], %26 {strides = array<i32>} : memref<2x2x8xf32, #tpu.memory_space<vmem>>, vector<1x2x8xf32>,
    %27 = arith.mulf %20, %22 : vector<2x8xf32>
    %c1_15 = arith.constant 1 : index
    %c0_16 = arith.constant 0 : index
    %c0_17 = arith.constant 0 : index
    %28 = vector.load %arg4[%c1_15, %c0_16, %c0_17] : memref<2x2x8xf32, #tpu.memory_space<vmem>>, vector<1x2x8xf32>
    %29 = vector.shape_cast %28 : vector<1x2x8xf32> to vector<2x8xf32>
    %30 = vector.shape_cast %27 : vector<2x8xf32> to vector<1x2x8xf32>
    tpu.vector_store %arg4[%c1_15, %c0_16, %c0_17], %30 {strides = array<i32>} : memref<2x2x8xf32, #tpu.memory_space<vmem>>, vector<1x2x8xf32>,
    return
  }
  func.func @transform_0(%arg0: i32) -> (i32, i32, i32) {
    %c0_i32 = arith.constant 0 : i32
    %c0_i32_0 = arith.constant 0 : i32
    %c0_i32_1 = arith.constant 0 : i32
    return %arg0, %c0_i32, %c0_i32_0 : i32, i32, i32
  }
  func.func @transform_1(%arg0: i32) -> (i32, i32) {
    %c0_i32 = arith.constant 0 : i32
    %c0_i32_0 = arith.constant 0 : i32
    %c0_i32_1 = arith.constant 0 : i32
    return %c0_i32, %c0_i32_0 : i32, i32
  }
  func.func @transform_2(%arg0: i32) -> (i32, i32) {
    %c0_i32 = arith.constant 0 : i32
    %c0_i32_0 = arith.constant 0 : i32
    %c0_i32_1 = arith.constant 0 : i32
    return %c0_i32, %c0_i32_0 : i32, i32
  }
  func.func @transform_3(%arg0: i32) -> (i32, i32, i32) {
    %c0_i32 = arith.constant 0 : i32
    %c0_i32_0 = arith.constant 0 : i32
    %c0_i32_1 = arith.constant 0 : i32
    return %c0_i32, %arg0, %c0_i32_0 : i32, i32, i32
  }
}

</mosaic_0001>

<llo_original>
// kernel: tpu_custom_call.1
$region0: #{tpu_custom_call.1}
  #allocation0 [shape = 'u32[]', space=smem, size = 0x4, offset = 0x4, fixed_abs, tag = 'smem constant byte address 0x4 - core index']
  #allocation1 [shape = 'u32[144,128]{1,0:T(1,128)}', space=vmem, size = 0x12000, scoped, tag = 'internal scratch']
  %s0 = inlined_call_operand.hbm [shape: f32[2,4,256], index: 0, kind: input, shape index: {}]
  %s1 = inlined_call_operand.vmem [shape: f32[8,4], index: 1, kind: input, shape index: {}]
  %s2 = inlined_call_operand.vmem [shape: f32[2,256], index: 2, kind: input, shape index: {}]
  %s3 = inlined_call_operand.hbm [shape: f32[2,2,8], index: 3, kind: output, shape index: {}]
  %s4 = sld [smem:[#allocation0]]
  $region26: #{tpu_custom_call.1} parent=0
    _
  %s6 = ssub.s32 1, %s4
  %s7 = scalar_select 0, %s6, %s4
  $region1: #{tpu_custom_call.1} parent=0
    #allocation2 [shape = 'u8[8192]{0}', space=vmem, size = 0x2000, scoped, tag = 'input window, operand 0, single buffered']
    #allocation3 [shape = 's32[1]{0}', space=sflag, size = 0x4, scoped, tag = 'scoped memory for tpu_custom_call.1']
    #allocation4 [shape = 's32[1]{0}', space=sflag, size = 0x4, scoped, tag = 'scoped memory for tpu_custom_call.1']
    #allocation5 [shape = 'u8[2048]{0}', space=vmem, size = 0x800, scoped, tag = 'output window, operand 0, single buffered']
    %8 = vsyncpa [#allocation3], 0
    %9 = vsyncpa [#allocation4], 0
    // Predicated region
    $region2: #{tpu_custom_call.1} parent=1 // pred_check
      _
    $region3: #{tpu_custom_call.1} parent=1 // pred_check_branch
      %11 = sbr.rel (0) target = $region5
    $region4: #{tpu_custom_call.1} parent=1 // pred_region
      %s13 = ssub.s32 256, 256
      %14 = vsyncadd [#allocation3], %s13
      %s15 = sshll.u32 [#allocation2], 4
      %s16 = int_to_ptr.vmem [resolvable:$true] %s15
      %21 = dma.hbm_to_vmem [thread:$0]  %s0, 256, %s16, [#allocation3], 128, 128, 8
    $region5: #{tpu_custom_call.1} parent=1 // pred_fallthru
      _
    // Predicated region
    $region6: #{tpu_custom_call.1} parent=1 // pred_check
      _
    $region7: #{tpu_custom_call.1} parent=1 // pred_check_branch
      %23 = sbr.rel (0) target = $region9
    $region8: #{tpu_custom_call.1} parent=1 // pred_region
      _
    $region9: #{tpu_custom_call.1} parent=1 // pred_fallthru
      _
    // Predicated region
    $region10: #{tpu_custom_call.1} parent=1 // pred_check
      _
    $region11: #{tpu_custom_call.1} parent=1 // pred_check_branch
      %25 = sbr.rel (0) target = $region13
    $region12: #{tpu_custom_call.1} parent=1 // pred_region
      _
    $region13: #{tpu_custom_call.1} parent=1 // pred_fallthru
      _
    // Predicated region
    $region14: #{tpu_custom_call.1} parent=1 // pred_check
      _
    $region15: #{tpu_custom_call.1} parent=1 // pred_check_branch
      %27 = sbr.rel (0) target = $region17
    $region16: #{tpu_custom_call.1} parent=1 // pred_region
      %28 = dma.done [#allocation3], 256
    $region17: #{tpu_custom_call.1} parent=1 // pred_fallthru
      _
    %v29 = vld [vmem:[#allocation2] sm:$0xff]
    %v30 = vld [vmem:[#allocation2 + $0x8] sm:$0xff]
    %v31 = vld [vmem:[%s1] sm:$0xff]
    %v33 = vcombine.high %v29, %v29
    %vm34 = vcmask 31744
    %v36 = vsel %vm34, %v31, 0
    %vm38 = vcmask 1043456
    %v39 = vsel %vm38, %v29, 0
    %v41 = vsel %vm38, %v33, 0
    %43 = vmatprep.subr.mxu0 0.0
    %44 = vmatpush1.msra.mxu0 0.0
    %45 = vmatprep.subr.mxu0 0.0
    %46 = vmatpush1.msra.mxu0 0.0
    %47 = vmatprep.subr.mxu0 0.0
    %48 = vmatpush1.msra.mxu0 0.0
    %49 = vmatprep.subr.mxu0 0.0
    %50 = vmatpush1.msra.mxu0 0.0
    %51 = vmatprep.subr.mxu0 0.0
    %52 = vmatpush1.msra.mxu0 0.0
    %53 = vmatprep.subr.mxu0 0.0
    %54 = vmatpush1.msra.mxu0 0.0
    %55 = vmatprep.subr.mxu0 0.0
    %56 = vmatpush1.msra.mxu0 0.0
    %57 = vmatprep.subr.mxu0 0.0
    %58 = vmatpush1.msra.mxu0 0.0
    %59 = vmatprep.subr.mxu0 0.0
    %60 = vmatpush1.msra.mxu0 0.0
    %61 = vmatprep.subr.mxu0 0.0
    %62 = vmatpush1.msra.mxu0 0.0
    %63 = vmatprep.subr.mxu0 0.0
    %64 = vmatpush1.msra.mxu0 0.0
    %65 = vmatprep.subr.mxu0 0.0
    %66 = vmatpush1.msra.mxu0 0.0
    %67 = vmatprep.subr.mxu0 0.0
    %68 = vmatpush1.msra.mxu0 0.0
    %69 = vmatprep.subr.mxu0 0.0
    %70 = vmatpush1.msra.mxu0 0.0
    %71 = vmatprep.subr.mxu0 0.0
    %72 = vmatpush1.msra.mxu0 0.0
    %73 = vmatprep.subr.mxu0 %v41
    %74 = vmatpush1.msra.mxu0 %v39
    %75 = vmatprep.subr.mxu0 0.0
    %76 = vmatpush2.msra.mxu0 0.0
    %77 = vmatprep.subr.mxu0 0.0
    %78 = vmatpush2.msra.mxu0 0.0
    %79 = vmatprep.subr.mxu0 0.0
    %80 = vmatpush2.msra.mxu0 0.0
    %81 = vmatprep.subr.mxu0 0.0
    %82 = vmatpush2.msra.mxu0 0.0
    %83 = vmatprep.subr.mxu0 0.0
    %84 = vmatpush2.msra.mxu0 0.0
    %85 = vmatprep.subr.mxu0 0.0
    %86 = vmatpush2.msra.mxu0 0.0
    %87 = vmatprep.subr.mxu0 0.0
    %88 = vmatpush2.msra.mxu0 0.0
    %89 = vmatprep.subr.mxu0 0.0
    %90 = vmatpush2.msra.mxu0 0.0
    %91 = vmatprep.subr.mxu0 0.0
    %92 = vmatpush2.msra.mxu0 0.0
    %93 = vmatprep.subr.mxu0 0.0
    %94 = vmatpush2.msra.mxu0 0.0
    %95 = vmatprep.subr.mxu0 0.0
    %96 = vmatpush2.msra.mxu0 0.0
    %97 = vmatprep.subr.mxu0 0.0
    %98 = vmatpush2.msra.mxu0 0.0
    %99 = vmatprep.subr.mxu0 0.0
    %100 = vmatpush2.msra.mxu0 0.0
    %101 = vmatprep.subr.mxu0 0.0
    %102 = vmatpush2.msra.mxu0 0.0
    %103 = vmatprep.subr.mxu0 0.0
    %104 = vmatpush2.msra.mxu0 0.0
    %105 = vmatprep.subr.mxu0 0.0
    %106 = vmatpush2.msra.mxu0 0.0
    %107 = vmatprep.mubr.f32.mxu0 0.0
    %108 = vmatmul.mubr.f32.gmra.mxu0 %v36
    %v109 = vpop.f32.mrf.mxu0
    %v110 = vadd.f32 0.0, %v109
    %v111 = vpop.f32.mrf.mxu0
    %v112 = vadd.f32 0.0, %v111
    %113 = vdwg.mxu0
    %v115 = vcombine.high %v30, %v30
    %v116 = vsel %vm38, %v30, 0
    %v118 = vsel %vm38, %v115, 0
    %120 = vmatprep.subr.mxu0 0.0
    %121 = vmatpush1.msra.mxu0 0.0
    %122 = vmatprep.subr.mxu0 0.0
    %123 = vmatpush1.msra.mxu0 0.0
    %124 = vmatprep.subr.mxu0 0.0
    %125 = vmatpush1.msra.mxu0 0.0
    %126 = vmatprep.subr.mxu0 0.0
    %127 = vmatpush1.msra.mxu0 0.0
    %128 = vmatprep.subr.mxu0 0.0
    %129 = vmatpush1.msra.mxu0 0.0
    %130 = vmatprep.subr.mxu0 0.0
    %131 = vmatpush1.msra.mxu0 0.0
    %132 = vmatprep.subr.mxu0 0.0
    %133 = vmatpush1.msra.mxu0 0.0
    %134 = vmatprep.subr.mxu0 0.0
    %135 = vmatpush1.msra.mxu0 0.0
    %136 = vmatprep.subr.mxu0 0.0
    %137 = vmatpush1.msra.mxu0 0.0
    %138 = vmatprep.subr.mxu0 0.0
    %139 = vmatpush1.msra.mxu0 0.0
    %140 = vmatprep.subr.mxu0 0.0
    %141 = vmatpush1.msra.mxu0 0.0
    %142 = vmatprep.subr.mxu0 0.0
    %143 = vmatpush1.msra.mxu0 0.0
    %144 = vmatprep.subr.mxu0 0.0
    %145 = vmatpush1.msra.mxu0 0.0
    %146 = vmatprep.subr.mxu0 0.0
    %147 = vmatpush1.msra.mxu0 0.0
    %148 = vmatprep.subr.mxu0 0.0
    %149 = vmatpush1.msra.mxu0 0.0
    %150 = vmatprep.subr.mxu0 %v118
    %151 = vmatpush1.msra.mxu0 %v116
    %152 = vmatprep.subr.mxu0 0.0
    %153 = vmatpush2.msra.mxu0 0.0
    %154 = vmatprep.subr.mxu0 0.0
    %155 = vmatpush2.msra.mxu0 0.0
    %156 = vmatprep.subr.mxu0 0.0
    %157 = vmatpush2.msra.mxu0 0.0
    %158 = vmatprep.subr.mxu0 0.0
    %159 = vmatpush2.msra.mxu0 0.0
    %160 = vmatprep.subr.mxu0 0.0
    %161 = vmatpush2.msra.mxu0 0.0
    %162 = vmatprep.subr.mxu0 0.0
    %163 = vmatpush2.msra.mxu0 0.0
    %164 = vmatprep.subr.mxu0 0.0
    %165 = vmatpush2.msra.mxu0 0.0
    %166 = vmatprep.subr.mxu0 0.0
    %167 = vmatpush2.msra.mxu0 0.0
    %168 = vmatprep.subr.mxu0 0.0
    %169 = vmatpush2.msra.mxu0 0.0
    %170 = vmatprep.subr.mxu0 0.0
    %171 = vmatpush2.msra.mxu0 0.0
    %172 = vmatprep.subr.mxu0 0.0
    %173 = vmatpush2.msra.mxu0 0.0
    %174 = vmatprep.subr.mxu0 0.0
    %175 = vmatpush2.msra.mxu0 0.0
    %176 = vmatprep.subr.mxu0 0.0
    %177 = vmatpush2.msra.mxu0 0.0
    %178 = vmatprep.subr.mxu0 0.0
    %179 = vmatpush2.msra.mxu0 0.0
    %180 = vmatprep.subr.mxu0 0.0
    %181 = vmatpush2.msra.mxu0 0.0
    %182 = vmatprep.subr.mxu0 0.0
    %183 = vmatpush2.msra.mxu0 0.0
    %184 = vmatprep.mubr.f32.mxu0 0.0
    %185 = vmatmul.mubr.f32.gmra.mxu0 %v36
    %v186 = vpop.f32.mrf.mxu0
    %v187 = vadd.f32 0.0, %v186
    %v188 = vpop.f32.mrf.mxu0
    %v189 = vadd.f32 0.0, %v188
    %190 = vdwg.mxu0
    %v191 = vld [vmem:[%s2] ss:$2 sm:$0x3]
    %s192 = scalar_lea.vmem %s2, 1
    %v193 = vld [vmem:[%s192] ss:$2 sm:$0x3]
    %v194 = vmax.f32 %v110, %v112
    %195 = vmax.xlane.f32.xlu0 %v194
    %v196 = vpop.xlane.xlu0 %195
    %v197 = vmax.f32 %v187, %v189
    %198 = vmax.xlane.f32.xlu0 %v197
    %v199 = vpop.xlane.xlu0 %198
    %v200 = vsub.f32 %v110, %v196
    %v201 = vsub.f32 %v112, %v196
    %v202 = vsub.f32 %v187, %v199
    %v203 = vsub.f32 %v189, %v199
    %v204 = vmul.f32 %v200, 1.442695
    %v205 = vpow.pop %v204
    %v206 = vmul.f32 %v201, 1.442695
    %v207 = vpow.pop %v206
    %v208 = vmul.f32 %v202, 1.442695
    %v209 = vpow.pop %v208
    %v210 = vmul.f32 %v203, 1.442695
    %v211 = vpow.pop %v210
    %v212 = vadd.f32 %v205, %v207
    %213 = vadd.xlane.f32.xlu0 %v212
    %v214 = vpop.xlane.xlu0 %213
    %v215 = vadd.f32 %v209, %v211
    %216 = vadd.xlane.f32.xlu0 %v215
    %v217 = vpop.xlane.xlu0 %216
    %v219 = vlaneseq
    %v220 = vshrl.u32 %v219, 7
    %v221 = vsub.s32 0, %v220
    %v222 = vrot.slane %v191, %v221
    %v223 = vlaneseq
    %v224 = vshrl.u32 %v223, 7
    %v225 = vsub.s32 1, %v224
    %v226 = vrot.slane %v191, %v225
    %v229 = vmul.f32 %v205, %v222
    %v230 = vmul.f32 %v207, %v226
    %v231 = vmul.f32 %v209, %v222
    %v232 = vmul.f32 %v211, %v226
    %v233 = vadd.f32 %v229, %v230
    %234 = vadd.xlane.f32.xlu0 %v233
    %v235 = vpop.xlane.xlu0 %234
    %v236 = vadd.f32 %v231, %v232
    %237 = vadd.xlane.f32.xlu0 %v236
    %v238 = vpop.xlane.xlu0 %237
    %v240 = vlaneseq
    %v241 = vshrl.u32 %v240, 7
    %v242 = vsub.s32 0, %v241
    %v243 = vrot.slane %v193, %v242
    %v244 = vlaneseq
    %v245 = vshrl.u32 %v244, 7
    %v246 = vsub.s32 1, %v245
    %v247 = vrot.slane %v193, %v246
    %v250 = vmul.f32 %v205, %v243
    %v251 = vmul.f32 %v207, %v247
    %v252 = vmul.f32 %v209, %v243
    %v253 = vmul.f32 %v211, %v247
    %v254 = vadd.f32 %v250, %v251
    %255 = vadd.xlane.f32.xlu0 %v254
    %v256 = vpop.xlane.xlu0 %255
    %v257 = vadd.f32 %v252, %v253
    %258 = vadd.xlane.f32.xlu0 %v257
    %v259 = vpop.xlane.xlu0 %258
    %v260 = vrcp.pop %v214
    %v261 = vmul.f32 1.0, %v260
    %v262 = vrcp.pop %v217
    %v263 = vmul.f32 1.0, %v262
    %v264 = vmul.f32 %v235, %v261
    %v265 = vmul.f32 %v238, %v263
    %v268 = vlaneseq
    %v269 = vand.u32 %v268, 127
    %v270 = vlaneseq
    %v271 = vshrl.u32 %v270, 7
    %v272 = vsub.s32 %v269, %v271
    %v273 = vrot.slane %v264, %v272
    %v274 = vlaneseq
    %v275 = vshrl.u32 %v274, 7
    %v276 = vsub.s32 %v269, %v275
    %v277 = vrot.slane %v265, %v276
    %vm278 = vcmask 1041409
    %v279 = vsel %vm278, %v277, %v273
    %vm281 = vcmask 58368
    %282 = vst.msk [vmem:[#allocation5] sm:$0x3] %vm281, %v279
    %v283 = vmul.f32 %v256, %v261
    %v284 = vmul.f32 %v259, %v263
    %v287 = vlaneseq
    %v288 = vshrl.u32 %v287, 7
    %v289 = vsub.s32 %v269, %v288
    %v290 = vrot.slane %v283, %v289
    %v291 = vlaneseq
    %v292 = vshrl.u32 %v291, 7
    %v293 = vsub.s32 %v269, %v292
    %v294 = vrot.slane %v284, %v293
    %v295 = vsel %vm278, %v294, %v290
    %s297 = scalar_lea.vmem [#allocation5], 2
    %298 = vst.msk [vmem:[%s297] sm:$0x3] %vm281, %v295
    // Predicated region
    $region18: #{tpu_custom_call.1} parent=1 // pred_check
      _
    $region19: #{tpu_custom_call.1} parent=1 // pred_check_branch
      %300 = sbr.rel (0) target = $region21
    $region20: #{tpu_custom_call.1} parent=1 // pred_region
      %s302 = ssub.s32 64, 64
      %303 = vsyncadd [#allocation4], %s302
      %s304 = sshll.u32 [#allocation5], 4
      %s305 = int_to_ptr.vmem [resolvable:$true] %s304
      %310 = dma.vmem_to_hbm [thread:$0]  %s305, 64, %s3, [#allocation4], 32, 32, 2
    $region21: #{tpu_custom_call.1} parent=1 // pred_fallthru
      _
    // Predicated region
    $region22: #{tpu_custom_call.1} parent=1 // pred_check
      _
    $region23: #{tpu_custom_call.1} parent=1 // pred_check_branch
      %312 = sbr.rel (0) target = $region25
    $region24: #{tpu_custom_call.1} parent=1 // pred_region
      %313 = dma.done [#allocation4], 64
    $region25: #{tpu_custom_call.1} parent=1 // pred_fallthru
      _
    %314 = vsyncpa [#allocation3], 1
    %315 = vsyncpa [#allocation4], 1

</llo_original>
